<compile_context>
chip_gen: v5e
topology: v5e:2x2
jax: 0.10.0
libtpu: 0.0.40
codegen_flags: <defaults>
</compile_context>

<pallas_src>
import jax
import jax.numpy as jnp
from jax.experimental import pallas as pl
from jax.experimental.pallas import tpu as pltpu


def _round_up(x, m):
    return (x + m - 1) // m * m


# ---------------------------------------------------------------------------
# Kernels: canonical (tm, tk) x (tk, tn) contraction.  Weight arrives already
# in (K, N) layout, so there is no per-tile transpose anywhere.
# ---------------------------------------------------------------------------
def _linear_kernel_f32_out(x_ref, w_ref, b_ref, o_ref):
    """f32 output: accumulate directly into the resident o_ref block."""
    k = pl.program_id(2)

    @pl.when(k == 0)
    def _init():
        # Seed the accumulator with the bias -> no epilogue pass needed.
        o_ref[...] = jnp.broadcast_to(b_ref[...], o_ref.shape)

    o_ref[...] += jnp.dot(x_ref[...], w_ref[...],
                          preferred_element_type=jnp.float32)


def _linear_kernel_narrow_out(x_ref, w_ref, b_ref, o_ref, acc_ref):
    """Narrow output dtype: f32 VMEM accumulator, single cast in the epilogue."""
    k = pl.program_id(2)

    @pl.when(k == 0)
    def _init():
        acc_ref[...] = jnp.broadcast_to(b_ref[...], acc_ref.shape)

    acc_ref[...] += jnp.dot(x_ref[...], w_ref[...],
                            preferred_element_type=jnp.float32)

    @pl.when(k == pl.num_programs(2) - 1)
    def _finalize():
        o_ref[...] = acc_ref[...].astype(o_ref.dtype)


# ---------------------------------------------------------------------------
# Module wrapper: weight/bias are prepared (transpose, pad, cast) exactly once.
# ---------------------------------------------------------------------------
class LinearCompartment:
    """Pallas port of Linear_compartment (the nn.Linear affine transform)."""

    def __init__(self, weight, bias, dropout=0.0, *,
                 tm=512, tn=512, tk=1024,
                 cast_operands_to_bf16=True,
                 out_dtype=None,
                 vmem_budget_bytes=28 * 1024 * 1024,
                 vmem_limit_bytes=48 * 1024 * 1024):
        # weight: [output_dim, input_dim] (PyTorch nn.Linear layout)
        N, K = weight.shape
        assert bias.shape == (N,)
        self.input_dim = K
        self.output_dim = N
        # TODO(synk): dropout is constructed but never applied in the original
        # forward(); kept only as an attribute.
        self.dropout_rate = float(dropout)

        self.operand_dtype = (jnp.dtype(jnp.bfloat16) if cast_operands_to_bf16
                              else jnp.dtype(weight.dtype))
        self.out_dtype = (jnp.dtype(out_dtype) if out_dtype is not None
                          else jnp.dtype(weight.dtype))
        self.vmem_limit_bytes = int(vmem_limit_bytes)

        # --- tile selection: clamp to the (aligned) problem, keep the
        #     double-buffered footprint under a v7x-safe VMEM budget. ---
        self.tm, self.tn, self.tk = self._choose_tiles(
            K, N, tm, tn, tk, vmem_budget_bytes)
        self.Kp = _round_up(K, self.tk)
        self.Np = _round_up(N, self.tn)

        # --- one-time weight/bias preparation (amortized across calls) ---
        wt = jnp.asarray(weight).T.astype(self.operand_dtype)    # (K, N)
        if (self.Kp, self.Np) != (K, N):
            wt = jnp.pad(wt, ((0, self.Kp - K), (0, self.Np - N)))
        self.w_kn = wt
        b = jnp.asarray(bias).astype(jnp.float32)
        if self.Np != N:
            b = jnp.pad(b, (0, self.Np - N))
        self.b_2d = b.reshape(1, self.Np)

    # .....................................................................
    def _choose_tiles(self, K, N, tm, tn, tk, budget):
        in_bytes = self.operand_dtype.itemsize
        out_bytes = self.out_dtype.itemsize
        sub = 16 if in_bytes == 2 else 8

        # Shrink defaults for small layers while keeping TPU alignment
        # (sublane 16 for bf16, lane 128 -> lane-dense unmasked stores).
        tm = max(sub, min(tm, _round_up(tm, sub)))
        tn = min(tn, _round_up(N, 128))
        tk = min(tk, _round_up(K, 128))

        def footprint(tm_, tn_, tk_):
            f = 2 * (tm_ * tk_ + tk_ * tn_) * in_bytes   # double-buffered inputs
            f += 2 * tm_ * tn_ * out_bytes               # double-buffered output
            f += 2 * tn_ * 4                             # bias tile
            if self.out_dtype != jnp.dtype(jnp.float32):
                f += tm_ * tn_ * 4                       # f32 scratch accumulator
            return f

        while footprint(tm, tn, tk) > budget and tk > 128:
            tk = max(128, _round_up(tk // 2, 128))
        while footprint(tm, tn, tk) > budget and tn > 128:
            tn = max(128, _round_up(tn // 2, 128))
        while footprint(tm, tn, tk) > budget and tm > sub:
            tm = max(sub, _round_up(tm // 2, sub))
        return tm, tn, tk

    # .....................................................................
    def __call__(self, input_x):
        x = jnp.asarray(input_x)
        lead_shape = x.shape[:-1]
        K = x.shape[-1]
        assert K == self.input_dim, "input_dim mismatch"
        x2d = x.reshape(-1, K)
        M = x2d.shape[0]
        N = self.output_dim

        in_bytes = self.operand_dtype.itemsize
        out_bytes = self.out_dtype.itemsize
        sub = 16 if in_bytes == 2 else 8

        tn, tk, Kp, Np = self.tn, self.tk, self.Kp, self.Np
        tm = min(self.tm, _round_up(M, sub))
        Mp = _round_up(M, tm)

        xo = x2d.astype(self.operand_dtype)
        if (Mp, Kp) != (M, K):
            # Zero-padding K contributes nothing to the contraction.
            xo = jnp.pad(xo, ((0, Mp - M), (0, Kp - K)))

        grid = (Mp // tm, Np // tn, Kp // tk)

        # Realistic advisory cost: x is re-read once per N tile, the weight
        # once per M tile.
        cost = pl.CostEstimate(
            flops=2 * Mp * Np * Kp,
            transcendentals=0,
            bytes_accessed=(Mp * Kp * in_bytes * (Np // tn)
                            + Kp * Np * in_bytes * (Mp // tm)
                            + Np * 4
                            + Mp * Np * out_bytes),
        )

        direct_f32 = (self.out_dtype == jnp.dtype(jnp.float32))
        kernel = _linear_kernel_f32_out if direct_f32 else _linear_kernel_narrow_out
        scratch = [] if direct_f32 else [pltpu.VMEM((tm, tn), jnp.float32)]

        out = pl.pallas_call(
            kernel,
            out_shape=jax.ShapeDtypeStruct((Mp, Np), self.out_dtype),
            grid_spec=pltpu.PrefetchScalarGridSpec(
                num_scalar_prefetch=0,
                grid=grid,
                in_specs=[
                    pl.BlockSpec((tm, tk), lambda i, j, k: (i, k)),   # x tile
                    pl.BlockSpec((tk, tn), lambda i, j, k: (k, j)),   # weight (K, N) tile
                    pl.BlockSpec((1, tn), lambda i, j, k: (0, j)),    # bias tile
                ],
                out_specs=pl.BlockSpec((tm, tn), lambda i, j, k: (i, j)),
                scratch_shapes=scratch,
            ),
            compiler_params=pltpu.CompilerParams(
                dimension_semantics=("parallel", "parallel", "arbitrary"),
                vmem_limit_bytes=self.vmem_limit_bytes,
            ),
            cost_estimate=cost,
        )(xo, self.w_kn, self.b_2d)

        if (Mp, Np) != (M, N):
            out = out[:M, :N]
        x1 = out.reshape(*lead_shape, N)
        # TODO(synk): original forward() returns None and skips dropout; we
        # return x1 so the result can be verified.
        return x1


if __name__ == "__main__":
    # Small deterministic setup consistent with the module:
    #   input_dim=32, output_dim=16, batch of 8 rows, dropout=0.1 (unused).
    input_dim, output_dim, dropout = 32, 16, 0.1
    batch = 8

    key = jax.random.PRNGKey(0)
    kx, kw, kb = jax.random.split(key, 3)

    # nn.Linear default init: U(-1/sqrt(in), 1/sqrt(in)) for weight and bias.
    bound = 1.0 / (input_dim ** 0.5)
    weight = jax.random.uniform(kw, (output_dim, input_dim),
                                minval=-bound, maxval=bound, dtype=jnp.float32)
    bias = jax.random.uniform(kb, (output_dim,),
                              minval=-bound, maxval=bound, dtype=jnp.float32)
    x = jax.random.normal(kx, (batch, input_dim), dtype=jnp.float32)

    module = LinearCompartment(weight, bias, dropout)
    x1 = module(x)
    x1 = jax.block_until_ready(x1)

    # Reference check in plain JAX (bf16 operands + f32 accumulation in the
    # kernel -> loosened tolerance vs. the pure-f32 reference).
    ref = x @ weight.T + bias
    assert x1.shape == ref.shape
    assert x1.dtype == ref.dtype
    max_err = float(jnp.max(jnp.abs(x1 - ref)))
    assert jnp.allclose(x1, ref, atol=2e-2, rtol=2e-2), (
        f"mismatch vs reference; max abs err = {max_err}")

    print("KERNEL_OK")
</pallas_src>

<mosaic_0001>
module attributes {stable_mosaic.version = 11 : i64} {
  func.func @_linear_kernel_f32_out(%arg0: i32, %arg1: i32, %arg2: i32, %arg3: memref<16x128xbf16, #tpu.memory_space<vmem>>, %arg4: memref<128x128xbf16, #tpu.memory_space<vmem>>, %arg5: memref<1x128xf32, #tpu.memory_space<vmem>>, %arg6: memref<16x128xf32, #tpu.memory_space<vmem>>) attributes {dimension_semantics = [#tpu.dimension_semantics<parallel>, #tpu.dimension_semantics<parallel>, #tpu.dimension_semantics<arbitrary>], iteration_bounds = array<i64: 1, 1, 1>, scalar_prefetch = 0 : i64, scratch_operands = 0 : i64, tpu.core_type = #tpu.core_type<tc>, window_params = [{transform_indices = @transform_0, window_bounds = array<i64: 16, 128>}, {transform_indices = @transform_1, window_bounds = array<i64: 128, 128>}, {transform_indices = @transform_2, window_bounds = array<i64: 1, 128>}, {transform_indices = @transform_3, window_bounds = array<i64: 16, 128>}]} {
    %c0_i32 = arith.constant 0 : i32
    %0 = arith.cmpi eq, %arg2, %c0_i32 : i32
    %1 = arith.extui %0 : i1 to i32
    %c0_i32_0 = arith.constant 0 : i32
    %2 = arith.cmpi ne, %1, %c0_i32_0 : i32
    scf.if %2 {
      %c0_8 = arith.constant 0 : index
      %c0_9 = arith.constant 0 : index
      %9 = vector.load %arg5[%c0_8, %c0_9] : memref<1x128xf32, #tpu.memory_space<vmem>>, vector<1x128xf32>
      %10 = vector.shape_cast %9 : vector<1x128xf32> to vector<1x128xf32>
      %11 = vector.broadcast %10 : vector<1x128xf32> to vector<16x128xf32>
      %c0_10 = arith.constant 0 : index
      %c0_11 = arith.constant 0 : index
      %12 = vector.load %arg6[%c0_10, %c0_11] : memref<16x128xf32, #tpu.memory_space<vmem>>, vector<16x128xf32>
      tpu.vector_store %arg6[%c0_10, %c0_11], %11 {strides = array<i32>} : memref<16x128xf32, #tpu.memory_space<vmem>>, vector<16x128xf32>,
    } else {
    }
    %c0 = arith.constant 0 : index
    %c0_1 = arith.constant 0 : index
    %3 = vector.load %arg6[%c0, %c0_1] : memref<16x128xf32, #tpu.memory_space<vmem>>, vector<16x128xf32>
    %c0_2 = arith.constant 0 : index
    %c0_3 = arith.constant 0 : index
    %4 = vector.load %arg3[%c0_2, %c0_3] : memref<16x128xbf16, #tpu.memory_space<vmem>>, vector<16x128xbf16>
    %c0_4 = arith.constant 0 : index
    %c0_5 = arith.constant 0 : index
    %5 = vector.load %arg4[%c0_4, %c0_5] : memref<128x128xbf16, #tpu.memory_space<vmem>>, vector<128x128xbf16>
    %cst = arith.constant dense<0.000000e+00> : vector<16x128xf32>
    %6 = tpu.matmul %4, %5, %cst {dimension_numbers = #tpu.dot_dimension_numbers<[1], [0], [0], [1], [0, 0, 1, 1], [], []>} : vector<16x128xbf16>, vector<128x128xbf16>, vector<16x128xf32> -> vector<16x128xf32>
    %7 = arith.addf %3, %6 : vector<16x128xf32>
    %c0_6 = arith.constant 0 : index
    %c0_7 = arith.constant 0 : index
    %8 = vector.load %arg6[%c0_6, %c0_7] : memref<16x128xf32, #tpu.memory_space<vmem>>, vector<16x128xf32>
    tpu.vector_store %arg6[%c0_6, %c0_7], %7 {strides = array<i32>} : memref<16x128xf32, #tpu.memory_space<vmem>>, vector<16x128xf32>,
    return
  }
  func.func @transform_0(%arg0: i32, %arg1: i32, %arg2: i32) -> (i32, i32) {
    %c0_i32 = arith.constant 0 : i32
    return %arg0, %arg2 : i32, i32
  }
  func.func @transform_1(%arg0: i32, %arg1: i32, %arg2: i32) -> (i32, i32) {
    %c0_i32 = arith.constant 0 : i32
    return %arg2, %arg1 : i32, i32
  }
  func.func @transform_2(%arg0: i32, %arg1: i32, %arg2: i32) -> (i32, i32) {
    %c0_i32 = arith.constant 0 : i32
    %c0_i32_0 = arith.constant 0 : i32
    return %c0_i32, %arg1 : i32, i32
  }
  func.func @transform_3(%arg0: i32, %arg1: i32, %arg2: i32) -> (i32, i32) {
    %c0_i32 = arith.constant 0 : i32
    return %arg0, %arg1 : i32, i32
  }
}

</mosaic_0001>

<llo_original>
// kernel: tpu_custom_call.1
$region0: #{tpu_custom_call.1}
  #allocation0 [shape = 'u32[]', space=smem, size = 0x4, offset = 0x4, fixed_abs, tag = 'smem constant byte address 0x4 - core index']
  #allocation1 [shape = 'u32[72,128]{1,0:T(1,128)}', space=vmem, size = 0x9000, scoped, tag = 'internal scratch']
  %s0 = inlined_call_operand.hbm [shape: bf16[16,128], index: 0, kind: input, shape index: {}]
  %s1 = inlined_call_operand.hbm [shape: bf16[128,128], index: 1, kind: input, shape index: {}]
  %s2 = inlined_call_operand.vmem [shape: f32[1,128], index: 2, kind: input, shape index: {}]
  %s3 = inlined_call_operand.hbm [shape: f32[16,128], index: 3, kind: output, shape index: {}]
  %s4 = sld [smem:[#allocation0]]
  $region34: #{tpu_custom_call.1} parent=0
    _
  %s6 = ssub.s32 1, %s4
  %s7 = scalar_select 0, %s6, %s4
  $region1: #{tpu_custom_call.1} parent=0
    #allocation2 [shape = 'u8[4096]{0}', space=vmem, size = 0x1000, scoped, tag = 'input window, operand 0, single buffered']
    #allocation3 [shape = 's32[1]{0}', space=sflag, size = 0x4, scoped, tag = 'scoped memory for tpu_custom_call.1']
    #allocation4 [shape = 's32[1]{0}', space=sflag, size = 0x4, scoped, tag = 'scoped memory for tpu_custom_call.1']
    #allocation5 [shape = 'u8[32768]{0}', space=vmem, size = 0x8000, scoped, tag = 'input window, operand 1, single buffered']
    #allocation6 [shape = 's32[1]{0}', space=sflag, size = 0x4, scoped, tag = 'scoped memory for tpu_custom_call.1']
    #allocation7 [shape = 'u8[8192]{0}', space=vmem, size = 0x2000, scoped, tag = 'output window, operand 0, single buffered']
    %8 = vsyncpa [#allocation3], 0
    %9 = vsyncpa [#allocation6], 0
    %10 = vsyncpa [#allocation4], 0
    // Predicated region
    $region2: #{tpu_custom_call.1} parent=1 // pred_check
      _
    $region3: #{tpu_custom_call.1} parent=1 // pred_check_branch
      %12 = sbr.rel (0) target = $region5
    $region4: #{tpu_custom_call.1} parent=1 // pred_region
      %14 = vsyncadd [#allocation3], 0
      %s15 = sshll.u32 %s0, 4
      %s16 = int_to_ptr.hbm [resolvable:$true] %s15
      %s17 = sshll.u32 [#allocation2], 4
      %s18 = int_to_ptr.vmem [resolvable:$true] %s17
      %23 = dma.hbm_to_vmem [thread:$0]  %s16, 128, %s18, [#allocation3], 64, 64, 4
    $region5: #{tpu_custom_call.1} parent=1 // pred_fallthru
      _
    // Predicated region
    $region6: #{tpu_custom_call.1} parent=1 // pred_check
      _
    $region7: #{tpu_custom_call.1} parent=1 // pred_check_branch
      %25 = sbr.rel (0) target = $region9
    $region8: #{tpu_custom_call.1} parent=1 // pred_region
      %27 = vsyncadd [#allocation6], 0
      %s28 = sshll.u32 %s1, 4
      %s29 = int_to_ptr.hbm [resolvable:$true] %s28
      %s30 = sshll.u32 [#allocation5], 4
      %s31 = int_to_ptr.vmem [resolvable:$true] %s30
      %36 = dma.hbm_to_vmem [thread:$0]  %s29, 1024, %s31, [#allocation6], 64, 64, 4
    $region9: #{tpu_custom_call.1} parent=1 // pred_fallthru
      _
    // Predicated region
    $region10: #{tpu_custom_call.1} parent=1 // pred_check
      _
    $region11: #{tpu_custom_call.1} parent=1 // pred_check_branch
      %38 = sbr.rel (0) target = $region13
    $region12: #{tpu_custom_call.1} parent=1 // pred_region
      _
    $region13: #{tpu_custom_call.1} parent=1 // pred_fallthru
      _
    // Predicated region
    $region14: #{tpu_custom_call.1} parent=1 // pred_check
      _
    $region15: #{tpu_custom_call.1} parent=1 // pred_check_branch
      %40 = sbr.rel (0) target = $region17
    $region16: #{tpu_custom_call.1} parent=1 // pred_region
      %42 = dma.done [#allocation3], 128
    $region17: #{tpu_custom_call.1} parent=1 // pred_fallthru
      _
    // Predicated region
    $region18: #{tpu_custom_call.1} parent=1 // pred_check
      _
    $region19: #{tpu_custom_call.1} parent=1 // pred_check_branch
      %44 = sbr.rel (0) target = $region21
    $region20: #{tpu_custom_call.1} parent=1 // pred_region
      %46 = dma.done [#allocation6], 1024
    $region21: #{tpu_custom_call.1} parent=1 // pred_fallthru
      _
    %p47 = scmp.eq.s32.totalorder 0, 0
    // Predicated region
    $region22: #{tpu_custom_call.1} parent=1 // pred_check
      %p48 = pneg %p47
    $region23: #{tpu_custom_call.1} parent=1 // pred_check_branch
      %50 = sbr.rel (%p48) target = $region25
    $region24: #{tpu_custom_call.1} parent=1 // pred_region
      %v51 = vld [vmem:[%s2] sm:$0x1]
      %v53 = vperm.slane %v51, 0
      %55 = vst [vmem:[#allocation7] sm:$0xff] %v53
      %56 = vst [vmem:[#allocation7 + $0x8] sm:$0xff] %v53
    $region25: #{tpu_custom_call.1} parent=1 // pred_fallthru
      _
    %v57 = vld [vmem:[#allocation7] sm:$0xff]
    %v58 = vld [vmem:[#allocation7 + $0x8] sm:$0xff]
    %v59 = vld [vmem:[#allocation2] sm:$0xf]
    %v60 = vld [vmem:[#allocation2 + $0x4] sm:$0xf]
    %v61 = vld [vmem:[#allocation5] sm:$0xf]
    %v62 = vld [vmem:[#allocation5 + $0x4] sm:$0xf]
    %v63 = vld [vmem:[#allocation5 + $0x8] sm:$0xf]
    %v64 = vld [vmem:[#allocation5 + $0xc] sm:$0xf]
    %v65 = vld [vmem:[#allocation5 + $0x10] sm:$0xf]
    %v66 = vld [vmem:[#allocation5 + $0x14] sm:$0xf]
    %v67 = vld [vmem:[#allocation5 + $0x18] sm:$0xf]
    %v68 = vld [vmem:[#allocation5 + $0x1c] sm:$0xf]
    %v69 = vld [vmem:[#allocation5 + $0x20] sm:$0xf]
    %v70 = vld [vmem:[#allocation5 + $0x24] sm:$0xf]
    %v71 = vld [vmem:[#allocation5 + $0x28] sm:$0xf]
    %v72 = vld [vmem:[#allocation5 + $0x2c] sm:$0xf]
    %v73 = vld [vmem:[#allocation5 + $0x30] sm:$0xf]
    %v74 = vld [vmem:[#allocation5 + $0x34] sm:$0xf]
    %v75 = vld [vmem:[#allocation5 + $0x38] sm:$0xf]
    %v76 = vld [vmem:[#allocation5 + $0x3c] sm:$0xf]
    %v79 = vunpack.c.l.b16 %v59
    %v80 = vunpack.c.l.b16 %v60
    %v81 = vpack.c.b16 %v80, %v79
    %v99 = vunpack.c.l.b16 %v61
    %v100 = vunpack.c.l.b16 %v62
    %v101 = vunpack.c.l.b16 %v63
    %v102 = vunpack.c.l.b16 %v64
    %v103 = vunpack.c.l.b16 %v65
    %v104 = vunpack.c.l.b16 %v66
    %v105 = vunpack.c.l.b16 %v67
    %v106 = vunpack.c.l.b16 %v68
    %v107 = vunpack.c.l.b16 %v69
    %v108 = vunpack.c.l.b16 %v70
    %v109 = vunpack.c.l.b16 %v71
    %v110 = vunpack.c.l.b16 %v72
    %v111 = vunpack.c.l.b16 %v73
    %v112 = vunpack.c.l.b16 %v74
    %v113 = vunpack.c.l.b16 %v75
    %v114 = vunpack.c.l.b16 %v76
    %v115 = vpack.c.b16 %v100, %v99
    %v116 = vpack.c.b16 %v102, %v101
    %v117 = vpack.c.b16 %v104, %v103
    %v118 = vpack.c.b16 %v106, %v105
    %v119 = vpack.c.b16 %v108, %v107
    %v120 = vpack.c.b16 %v110, %v109
    %v121 = vpack.c.b16 %v112, %v111
    %v122 = vpack.c.b16 %v114, %v113
    %131 = vmatpush.bf16.msra.mxu0 %v122
    %132 = vmatpush.bf16.msra.mxu0 %v121
    %133 = vmatpush.bf16.msra.mxu0 %v120
    %134 = vmatpush.bf16.msra.mxu0 %v119
    %135 = vmatpush.bf16.msra.mxu0 %v118
    %136 = vmatpush.bf16.msra.mxu0 %v117
    %137 = vmatpush.bf16.msra.mxu0 %v116
    %138 = vmatpush.bf16.msra.mxu0 %v115
    %139 = vmatmul.bf16.gmra.mxu0 %v81
    %v140 = vpop.f32.mrf.mxu0
    %v141 = vadd.f32 0.0, %v140
    %v142 = vpop.f32.mrf.mxu0
    %v143 = vadd.f32 0.0, %v142
    %144 = vdwg.mxu0
    %v145 = vadd.f32 %v57, %v141
    %v146 = vadd.f32 %v58, %v143
    %147 = vst [vmem:[#allocation7] sm:$0xff] %v145
    %148 = vst [vmem:[#allocation7 + $0x8] sm:$0xff] %v146
    // Predicated region
    $region26: #{tpu_custom_call.1} parent=1 // pred_check
      _
    $region27: #{tpu_custom_call.1} parent=1 // pred_check_branch
      %150 = sbr.rel (0) target = $region29
    $region28: #{tpu_custom_call.1} parent=1 // pred_region
      %152 = vsyncadd [#allocation4], 0
      %s153 = sshll.u32 [#allocation7], 4
      %s154 = int_to_ptr.vmem [resolvable:$true] %s153
      %s155 = sshll.u32 %s3, 4
      %s156 = int_to_ptr.hbm [resolvable:$true] %s155
      %161 = dma.vmem_to_hbm [thread:$0]  %s154, 256, %s156, [#allocation4], 128, 128, 8
    $region29: #{tpu_custom_call.1} parent=1 // pred_fallthru
      _
    // Predicated region
    $region30: #{tpu_custom_call.1} parent=1 // pred_check
      _
    $region31: #{tpu_custom_call.1} parent=1 // pred_check_branch
      %163 = sbr.rel (0) target = $region33
    $region32: #{tpu_custom_call.1} parent=1 // pred_region
      %165 = dma.done [#allocation4], 256
    $region33: #{tpu_custom_call.1} parent=1 // pred_fallthru
      _
    %166 = vsyncpa [#allocation3], 1
    %167 = vsyncpa [#allocation6], 1
    %168 = vsyncpa [#allocation4], 1

</llo_original>
